<compile_context>
chip_gen: v7x
topology: tpu7x:2x2x1
jax: 0.10.0
libtpu: 0.0.40
codegen_flags: <defaults>
</compile_context>

<pallas_src>
import functools

import jax
import jax.numpy as jnp
from jax.experimental import pallas as pl
from jax.experimental.pallas import tpu as pltpu


def _round_up(x, m):
    return ((x + m - 1) // m) * m


def _separator_gum_kernel(
    # inputs
    feat_ref,      # [tile_n, F]  bf16  node features (rationale_gnn_node input)
    h_node_ref,    # [tile_n, H]  bf16  h_node
    batch_ref,     # [1, tile_n]  int32 graph id per node (lane-major)
    u_ref,         # [tile_n, 1]  f32   uniform(0,1) noise
    wg_ref,        # [F, H] bf16
    bg_ref,        # [1, H] f32
    wdiff_ref,     # [H, 1] f32   (gate_nn W[:,1] - W[:,0])
    bdiff_ref,     # [1, 1] f32   (gate_nn b[1]  - b[0])
    wnn_ref,       # [H, H] bf16
    bnn_ref,       # [1, H] f32
    # outputs
    hout_ref,      # [G, H]  h_out
    cout_ref,      # [G, H]  c_out
    rnum_ref,      # [G, 1]  r_node_num
    envnum_ref,    # [G, 1]  env_node_num
    gate_ref,      # [tile_n, 1] gate (per node)
    # scratch accumulators (persist across the N-tile grid)
    acc_g_ref,     # [G, H] sum_g(gate * h)
    acc_h_ref,     # [G, H] sum_g(h)
    acc_r_ref,     # [G, 1] sum_g(gate)
    acc_c_ref,     # [G, 1] node count per graph
):
    f32 = jnp.float32
    i = pl.program_id(0)
    n_tiles = pl.num_programs(0)

    @pl.when(i == 0)
    def _init():
        acc_g_ref[...] = jnp.zeros_like(acc_g_ref)
        acc_h_ref[...] = jnp.zeros_like(acc_h_ref)
        acc_r_ref[...] = jnp.zeros_like(acc_r_ref)
        acc_c_ref[...] = jnp.zeros_like(acc_c_ref)

    # ---- rationale_gnn_node: x = relu(feat @ Wg + bg)   (bf16 MXU, f32 acc) ----
    x = jnp.dot(feat_ref[...], wg_ref[...], preferred_element_type=f32) + bg_ref[...]
    x = jnp.maximum(x, 0.0)

    # ---- nn: h = h_node @ Wnn + bnn                     (bf16 MXU, f32 acc) ----
    h = jnp.dot(h_node_ref[...], wnn_ref[...], preferred_element_type=f32) + bnn_ref[...]

    # ---- gate_nn + F.gumbel_softmax(hard=False, tau=1)[:, -1]
    # For 2 classes: softmax(l + g)[:, 1] == sigmoid((l1 - l0) + (g1 - g0)),
    # and g1 - g0 ~ Logistic(0,1) == log(u) - log(1-u).
    logit = jnp.dot(x, wdiff_ref[...], preferred_element_type=f32) + bdiff_ref[...]
    u = jnp.clip(u_ref[...], 1e-6, 1.0 - 1e-6)
    noise = jnp.log(u) - jnp.log(1.0 - u)
    gate = 1.0 / (1.0 + jnp.exp(-(logit + noise)))          # [tile_n, 1]
    gate_ref[...] = gate

    # ---- segment reductions via [G, tile_n] one-hot built in transposed layout ----
    g = acc_g_ref.shape[0]
    tile_n = feat_ref.shape[0]
    seg_iota = jax.lax.broadcasted_iota(jnp.int32, (g, tile_n), 0)
    onehot = (batch_ref[...] == seg_iota).astype(f32)       # padded rows -> all-zero col

    gated = gate * h                                        # [tile_n, H]
    acc_g_ref[...] += jnp.dot(onehot, gated, preferred_element_type=f32)
    acc_h_ref[...] += jnp.dot(onehot, h, preferred_element_type=f32)
    acc_r_ref[...] += jnp.dot(onehot, gate, preferred_element_type=f32)
    acc_c_ref[...] += jnp.sum(onehot, axis=1, keepdims=True)

    @pl.when(i == n_tiles - 1)
    def _finalize():
        counts = acc_c_ref[...]
        inv = jnp.where(counts > 0.0, 1.0 / counts, 0.0)
        sum_g = acc_g_ref[...]
        sum_h = acc_h_ref[...]
        rnum = acc_r_ref[...]
        hout_ref[...] = sum_g * inv                          # global_mean_pool(gate*h)
        cout_ref[...] = (sum_h - sum_g) * inv                # global_mean_pool((1-gate)*h)
        rnum_ref[...] = rnum + 1e-8
        envnum_ref[...] = (counts - rnum) + 1e-8


@functools.partial(jax.jit, static_argnames=("num_graphs", "tile_n"))
def separator_gum_forward(feat, h_node, batch, u_noise, params, num_graphs,
                          tile_n=512):
    """Pallas implementation of separator_gum.forward.

    Returns (h_out, c_out, r_node_num + 1e-8, env_node_num + 1e-8, gate).
    """
    n, f_in = feat.shape
    h_dim = h_node.shape[1]
    g = num_graphs

    f32 = jnp.float32
    bf16 = jnp.bfloat16

    # --- choose the node tile ---
    if n <= tile_n:
        tile = max(_round_up(n, 16), 16)     # bf16 sublane packing
        n_pad = tile
    else:
        assert tile_n % 128 == 0, "tile_n must be a multiple of 128 when tiling"
        tile = tile_n
        n_pad = _round_up(n, tile)
    n_tiles = n_pad // tile
    pad = n_pad - n

    # --- pad + cast inputs (padded nodes get graph id == g -> all-zero one-hot) ---
    feat_p = jnp.pad(feat.astype(f32), ((0, pad), (0, 0))).astype(bf16)
    h_node_p = jnp.pad(h_node.astype(f32), ((0, pad), (0, 0))).astype(bf16)
    batch_p = jnp.pad(batch.astype(jnp.int32), (0, pad),
                      constant_values=g).reshape(1, n_pad)
    u_p = jnp.pad(u_noise.reshape(n, 1).astype(f32), ((0, pad), (0, 0)),
                  constant_values=0.5)

    wg = params["wg"].astype(bf16)
    bg = params["bg"].astype(f32).reshape(1, h_dim)
    wnn = params["wnn"].astype(bf16)
    bnn = params["bnn"].astype(f32).reshape(1, h_dim)
    wgate = params["wgate"].astype(f32)
    bgate = params["bgate"].astype(f32).reshape(1, 2)
    wdiff = wgate[:, 1:2] - wgate[:, 0:1]                    # [H, 1]
    bdiff = bgate[:, 1:2] - bgate[:, 0:1]                    # [1, 1]

    in_arrays = (feat_p, h_node_p, batch_p, u_p, wg, bg, wdiff, bdiff, wnn, bnn)

    def _tile_rows(shape):
        cols = shape[1]
        return pl.BlockSpec((tile, cols), lambda i: (i, 0))

    def _whole(shape):
        return pl.BlockSpec(shape, lambda i: (0, 0))

    in_specs = [
        _tile_rows(feat_p.shape),
        _tile_rows(h_node_p.shape),
        pl.BlockSpec((1, tile), lambda i: (0, i)),   # batch ids, lane-major
        _tile_rows(u_p.shape),
        _whole(wg.shape),
        _whole(bg.shape),
        _whole(wdiff.shape),
        _whole(bdiff.shape),
        _whole(wnn.shape),
        _whole(bnn.shape),
    ]

    out_shape = (
        jax.ShapeDtypeStruct((g, h_dim), f32),   # h_out
        jax.ShapeDtypeStruct((g, h_dim), f32),   # c_out
        jax.ShapeDtypeStruct((g, 1), f32),       # r_node_num
        jax.ShapeDtypeStruct((g, 1), f32),       # env_node_num
        jax.ShapeDtypeStruct((n_pad, 1), f32),   # gate (padded)
    )
    out_specs = (
        _whole((g, h_dim)),
        _whole((g, h_dim)),
        _whole((g, 1)),
        _whole((g, 1)),
        pl.BlockSpec((tile, 1), lambda i: (i, 0)),
    )

    cost = pl.CostEstimate(
        flops=2 * n_pad * (f_in * h_dim + h_dim * h_dim + h_dim)
              + 2 * n_pad * g * (2 * h_dim + 2),
        transcendentals=4 * n_pad,
        bytes_accessed=(feat_p.size * 2 + h_node_p.size * 2 + n_pad * 4 + n_pad * 4
                        + (f_in * h_dim + h_dim * h_dim + 2 * h_dim + h_dim + 1) * 4
                        + 2 * g * h_dim * 4 + 2 * g * 4 + n_pad * 4),
    )

    outs = pl.pallas_call(
        _separator_gum_kernel,
        grid=(n_tiles,),
        in_specs=in_specs,
        out_specs=out_specs,
        out_shape=out_shape,
        scratch_shapes=[
            pltpu.VMEM((g, h_dim), f32),
            pltpu.VMEM((g, h_dim), f32),
            pltpu.VMEM((g, 1), f32),
            pltpu.VMEM((g, 1), f32),
        ],
        compiler_params=pltpu.CompilerParams(
            dimension_semantics=("arbitrary",),   # reduction over node tiles
            vmem_limit_bytes=32 * 1024 * 1024,
        ),
        cost_estimate=cost,
    )(*in_arrays)

    h_out, c_out, r_num, env_num, gate_pad = outs
    return h_out, c_out, r_num, env_num, gate_pad[:n]


def _init_params(key, f_in, h_dim):
    ks = jax.random.split(key, 6)
    scale_g = 1.0 / jnp.sqrt(f_in)
    scale_h = 1.0 / jnp.sqrt(h_dim)
    return {
        "wg": jax.random.uniform(ks[0], (f_in, h_dim), jnp.float32, -scale_g, scale_g),
        "bg": jax.random.uniform(ks[1], (1, h_dim), jnp.float32, -scale_g, scale_g),
        "wgate": jax.random.uniform(ks[2], (h_dim, 2), jnp.float32, -scale_h, scale_h),
        "bgate": jax.random.uniform(ks[3], (1, 2), jnp.float32, -scale_h, scale_h),
        "wnn": jax.random.uniform(ks[4], (h_dim, h_dim), jnp.float32, -scale_h, scale_h),
        "bnn": jax.random.uniform(ks[5], (1, h_dim), jnp.float32, -scale_h, scale_h),
    }


def _reference(feat, h_node, batch, u, params, g):
    # Pure-JAX f32 reference with the same noise parameterization.
    f32 = jnp.float32
    x = jnp.maximum(feat @ params["wg"] + params["bg"], 0.0)
    logits = x @ params["wgate"] + params["bgate"]                    # [N, 2]
    u = jnp.clip(u.reshape(-1, 1), 1e-6, 1.0 - 1e-6)
    noise = jnp.log(u) - jnp.log(1.0 - u)
    gate = jax.nn.sigmoid((logits[:, 1:2] - logits[:, 0:1]) + noise)  # [N, 1]
    h = h_node @ params["wnn"] + params["bnn"]
    onehot = (batch[:, None] == jnp.arange(g)[None, :]).astype(f32)   # [N, G]
    counts = onehot.sum(0)[:, None]
    sum_g = onehot.T @ (gate * h)
    sum_h = onehot.T @ h
    rnum = onehot.T @ gate
    return (sum_g / counts, (sum_h - sum_g) / counts,
            rnum + 1e-8, (counts - rnum) + 1e-8, gate)


def _check(outs, refs, atol=5e-2, rtol=5e-2):
    for o, r in zip(outs, refs):
        assert o.shape == r.shape, (o.shape, r.shape)
        assert bool(jnp.all(jnp.isfinite(o)))
        assert bool(jnp.allclose(o, r, atol=atol, rtol=rtol)), (
            float(jnp.max(jnp.abs(o - r))))


if __name__ == "__main__":
    key = jax.random.PRNGKey(0)
    k_feat, k_h, k_u, k_param, k2 = jax.random.split(key, 5)

    # --- small case (single node tile) ---
    N, F_IN, H, G = 16, 8, 32, 2
    feat = jax.random.normal(k_feat, (N, F_IN), jnp.float32)          # batched_data.x
    h_node = jax.random.normal(k_h, (N, H), jnp.float32)              # h_node
    batch = jnp.concatenate([jnp.zeros((N // 2,), jnp.int32),
                             jnp.ones((N // 2,), jnp.int32)])         # batched_data.batch
    u_noise = jax.random.uniform(k_u, (N, 1), jnp.float32,
                                 minval=1e-6, maxval=1.0 - 1e-6)
    params = _init_params(k_param, F_IN, H)

    outs = separator_gum_forward(feat, h_node, batch, u_noise, params, num_graphs=G)
    outs = jax.block_until_ready(outs)
    _check(outs, _reference(feat, h_node, batch, u_noise, params, G))

    # --- larger case exercising the multi-tile accumulation + padding path ---
    N2, G2 = 300, 3
    k_f2, k_h2, k_u2 = jax.random.split(k2, 3)
    feat2 = jax.random.normal(k_f2, (N2, F_IN), jnp.float32)
    h_node2 = jax.random.normal(k_h2, (N2, H), jnp.float32)
    batch2 = jnp.sort(jax.random.randint(k2, (N2,), 0, G2)).astype(jnp.int32)
    u2 = jax.random.uniform(k_u2, (N2, 1), jnp.float32,
                            minval=1e-6, maxval=1.0 - 1e-6)
    outs2 = separator_gum_forward(feat2, h_node2, batch2, u2, params,
                                  num_graphs=G2, tile_n=128)
    outs2 = jax.block_until_ready(outs2)
    _check(outs2, _reference(feat2, h_node2, batch2, u2, params, G2))

    print("KERNEL_OK")
</pallas_src>

<mosaic_0001>
module attributes {stable_mosaic.version = 11 : i64} {
  func.func @_separator_gum_kernel(%arg0: i32, %arg1: memref<16x8xbf16, #tpu.memory_space<vmem>>, %arg2: memref<16x32xbf16, #tpu.memory_space<vmem>>, %arg3: memref<1x16xi32, #tpu.memory_space<vmem>>, %arg4: memref<16x1xf32, #tpu.memory_space<vmem>>, %arg5: memref<8x32xbf16, #tpu.memory_space<vmem>>, %arg6: memref<1x32xf32, #tpu.memory_space<vmem>>, %arg7: memref<32x1xf32, #tpu.memory_space<vmem>>, %arg8: memref<1x1xf32, #tpu.memory_space<vmem>>, %arg9: memref<32x32xbf16, #tpu.memory_space<vmem>>, %arg10: memref<1x32xf32, #tpu.memory_space<vmem>>, %arg11: memref<2x32xf32, #tpu.memory_space<vmem>>, %arg12: memref<2x32xf32, #tpu.memory_space<vmem>>, %arg13: memref<2x1xf32, #tpu.memory_space<vmem>>, %arg14: memref<2x1xf32, #tpu.memory_space<vmem>>, %arg15: memref<16x1xf32, #tpu.memory_space<vmem>>, %arg16: memref<2x32xf32, #tpu.memory_space<vmem>>, %arg17: memref<2x32xf32, #tpu.memory_space<vmem>>, %arg18: memref<2x1xf32, #tpu.memory_space<vmem>>, %arg19: memref<2x1xf32, #tpu.memory_space<vmem>>) attributes {dimension_semantics = [#tpu.dimension_semantics<arbitrary>], iteration_bounds = array<i64: 1>, scalar_prefetch = 0 : i64, scratch_operands = 4 : i64, tpu.core_type = #tpu.core_type<tc>, window_params = [{transform_indices = @transform_0, window_bounds = array<i64: 16, 8>}, {transform_indices = @transform_1, window_bounds = array<i64: 16, 32>}, {transform_indices = @transform_2, window_bounds = array<i64: 1, 16>}, {transform_indices = @transform_3, window_bounds = array<i64: 16, 1>}, {pipeline_mode = #tpu.pipeline_mode<synchronous>, transform_indices = @transform_4, window_bounds = array<i64: 8, 32>}, {pipeline_mode = #tpu.pipeline_mode<synchronous>, transform_indices = @transform_5, window_bounds = array<i64: 1, 32>}, {pipeline_mode = #tpu.pipeline_mode<synchronous>, transform_indices = @transform_6, window_bounds = array<i64: 32, 1>}, {pipeline_mode = #tpu.pipeline_mode<synchronous>, transform_indices = @transform_7, window_bounds = array<i64: 1, 1>}, {pipeline_mode = #tpu.pipeline_mode<synchronous>, transform_indices = @transform_8, window_bounds = array<i64: 32, 32>}, {pipeline_mode = #tpu.pipeline_mode<synchronous>, transform_indices = @transform_9, window_bounds = array<i64: 1, 32>}, {pipeline_mode = #tpu.pipeline_mode<synchronous>, transform_indices = @transform_10, window_bounds = array<i64: 2, 32>}, {pipeline_mode = #tpu.pipeline_mode<synchronous>, transform_indices = @transform_11, window_bounds = array<i64: 2, 32>}, {pipeline_mode = #tpu.pipeline_mode<synchronous>, transform_indices = @transform_12, window_bounds = array<i64: 2, 1>}, {pipeline_mode = #tpu.pipeline_mode<synchronous>, transform_indices = @transform_13, window_bounds = array<i64: 2, 1>}, {transform_indices = @transform_14, window_bounds = array<i64: 16, 1>}]} {
    %c0_i32 = arith.constant 0 : i32
    %0 = arith.cmpi eq, %arg0, %c0_i32 : i32
    %1 = arith.extui %0 : i1 to i32
    %c0_i32_0 = arith.constant 0 : i32
    %2 = arith.cmpi ne, %1, %c0_i32_0 : i32
    scf.if %2 {
      %cst_53 = arith.constant 0.000000e+00 : f32
      %69 = vector.broadcast %cst_53 : f32 to vector<2x32xf32>
      %c0_54 = arith.constant 0 : index
      %c0_55 = arith.constant 0 : index
      %70 = vector.load %arg16[%c0_54, %c0_55] : memref<2x32xf32, #tpu.memory_space<vmem>>, vector<2x32xf32>
      tpu.vector_store %arg16[%c0_54, %c0_55], %69 {strides = array<i32>} : memref<2x32xf32, #tpu.memory_space<vmem>>, vector<2x32xf32>,
      %cst_56 = arith.constant 0.000000e+00 : f32
      %71 = vector.broadcast %cst_56 : f32 to vector<2x32xf32>
      %c0_57 = arith.constant 0 : index
      %c0_58 = arith.constant 0 : index
      %72 = vector.load %arg17[%c0_57, %c0_58] : memref<2x32xf32, #tpu.memory_space<vmem>>, vector<2x32xf32>
      tpu.vector_store %arg17[%c0_57, %c0_58], %71 {strides = array<i32>} : memref<2x32xf32, #tpu.memory_space<vmem>>, vector<2x32xf32>,
      %cst_59 = arith.constant 0.000000e+00 : f32
      %73 = vector.broadcast %cst_59 : f32 to vector<2x1xf32>
      %c0_60 = arith.constant 0 : index
      %c0_61 = arith.constant 0 : index
      %74 = vector.load %arg18[%c0_60, %c0_61] : memref<2x1xf32, #tpu.memory_space<vmem>>, vector<2x1xf32>
      tpu.vector_store %arg18[%c0_60, %c0_61], %73 {strides = array<i32>} : memref<2x1xf32, #tpu.memory_space<vmem>>, vector<2x1xf32>,
      %cst_62 = arith.constant 0.000000e+00 : f32
      %75 = vector.broadcast %cst_62 : f32 to vector<2x1xf32>
      %c0_63 = arith.constant 0 : index
      %c0_64 = arith.constant 0 : index
      %76 = vector.load %arg19[%c0_63, %c0_64] : memref<2x1xf32, #tpu.memory_space<vmem>>, vector<2x1xf32>
      tpu.vector_store %arg19[%c0_63, %c0_64], %75 {strides = array<i32>} : memref<2x1xf32, #tpu.memory_space<vmem>>, vector<2x1xf32>,
    } else {
    }
    %c0 = arith.constant 0 : index
    %c0_1 = arith.constant 0 : index
    %3 = vector.load %arg1[%c0, %c0_1] : memref<16x8xbf16, #tpu.memory_space<vmem>>, vector<16x8xbf16>
    %c0_2 = arith.constant 0 : index
    %c0_3 = arith.constant 0 : index
    %4 = vector.load %arg5[%c0_2, %c0_3] : memref<8x32xbf16, #tpu.memory_space<vmem>>, vector<8x32xbf16>
    %cst = arith.constant dense<0.000000e+00> : vector<16x32xf32>
    %5 = tpu.matmul %3, %4, %cst {dimension_numbers = #tpu.dot_dimension_numbers<[1], [0], [0], [1], [0, 0, 1, 1], [], []>} : vector<16x8xbf16>, vector<8x32xbf16>, vector<16x32xf32> -> vector<16x32xf32>
    %c0_4 = arith.constant 0 : index
    %c0_5 = arith.constant 0 : index
    %6 = vector.load %arg6[%c0_4, %c0_5] : memref<1x32xf32, #tpu.memory_space<vmem>>, vector<1x32xf32>
    %7 = vector.broadcast %6 : vector<1x32xf32> to vector<16x32xf32>
    %8 = arith.addf %5, %7 : vector<16x32xf32>
    %cst_6 = arith.constant 0.000000e+00 : f32
    %9 = vector.broadcast %cst_6 : f32 to vector<16x32xf32>
    %10 = arith.maximumf %8, %9 : vector<16x32xf32>
    %c0_7 = arith.constant 0 : index
    %c0_8 = arith.constant 0 : index
    %11 = vector.load %arg2[%c0_7, %c0_8] : memref<16x32xbf16, #tpu.memory_space<vmem>>, vector<16x32xbf16>
    %c0_9 = arith.constant 0 : index
    %c0_10 = arith.constant 0 : index
    %12 = vector.load %arg9[%c0_9, %c0_10] : memref<32x32xbf16, #tpu.memory_space<vmem>>, vector<32x32xbf16>
    %cst_11 = arith.constant dense<0.000000e+00> : vector<16x32xf32>
    %13 = tpu.matmul %11, %12, %cst_11 {dimension_numbers = #tpu.dot_dimension_numbers<[1], [0], [0], [1], [0, 0, 1, 1], [], []>} : vector<16x32xbf16>, vector<32x32xbf16>, vector<16x32xf32> -> vector<16x32xf32>
    %c0_12 = arith.constant 0 : index
    %c0_13 = arith.constant 0 : index
    %14 = vector.load %arg10[%c0_12, %c0_13] : memref<1x32xf32, #tpu.memory_space<vmem>>, vector<1x32xf32>
    %15 = vector.broadcast %14 : vector<1x32xf32> to vector<16x32xf32>
    %16 = arith.addf %13, %15 : vector<16x32xf32>
    %c0_14 = arith.constant 0 : index
    %c0_15 = arith.constant 0 : index
    %17 = vector.load %arg7[%c0_14, %c0_15] : memref<32x1xf32, #tpu.memory_space<vmem>>, vector<32x1xf32>
    %cst_16 = arith.constant dense<0.000000e+00> : vector<16x1xf32>
    %18 = tpu.matmul %10, %17, %cst_16 {dimension_numbers = #tpu.dot_dimension_numbers<[1], [0], [0], [1], [0, 0, 1, 1], [], []>} : vector<16x32xf32>, vector<32x1xf32>, vector<16x1xf32> -> vector<16x1xf32>
    %c0_17 = arith.constant 0 : index
    %c0_18 = arith.constant 0 : index
    %19 = vector.load %arg8[%c0_17, %c0_18] : memref<1x1xf32, #tpu.memory_space<vmem>>, vector<1x1xf32>
    %20 = vector.broadcast %19 : vector<1x1xf32> to vector<16x1xf32>
    %21 = arith.addf %18, %20 : vector<16x1xf32>
    %c0_19 = arith.constant 0 : index
    %c0_20 = arith.constant 0 : index
    %22 = vector.load %arg4[%c0_19, %c0_20] : memref<16x1xf32, #tpu.memory_space<vmem>>, vector<16x1xf32>
    %cst_21 = arith.constant 9.99999997E-7 : f32
    %cst_22 = arith.constant 0.999998986 : f32
    %23 = vector.broadcast %cst_21 : f32 to vector<16x1xf32>
    %24 = arith.maximumf %23, %22 : vector<16x1xf32>
    %25 = vector.broadcast %cst_22 : f32 to vector<16x1xf32>
    %26 = arith.minimumf %25, %24 : vector<16x1xf32>
    %27 = math.log %26 : vector<16x1xf32>
    %cst_23 = arith.constant 1.000000e+00 : f32
    %28 = vector.broadcast %cst_23 : f32 to vector<16x1xf32>
    %29 = arith.subf %28, %26 : vector<16x1xf32>
    %30 = math.log %29 : vector<16x1xf32>
    %31 = arith.subf %27, %30 : vector<16x1xf32>
    %32 = arith.addf %21, %31 : vector<16x1xf32>
    %cst_24 = arith.constant 0.000000e+00 : f32
    %33 = vector.broadcast %cst_24 : f32 to vector<16x1xf32>
    %34 = arith.subf %33, %32 : vector<16x1xf32>
    %35 = math.exp %34 : vector<16x1xf32>
    %cst_25 = arith.constant 1.000000e+00 : f32
    %36 = vector.broadcast %cst_25 : f32 to vector<16x1xf32>
    %37 = arith.addf %36, %35 : vector<16x1xf32>
    %cst_26 = arith.constant 1.000000e+00 : f32
    %38 = vector.broadcast %cst_26 : f32 to vector<16x1xf32>
    %39 = arith.divf %38, %37 : vector<16x1xf32>
    %c0_27 = arith.constant 0 : index
    %c0_28 = arith.constant 0 : index
    %40 = vector.load %arg15[%c0_27, %c0_28] : memref<16x1xf32, #tpu.memory_space<vmem>>, vector<16x1xf32>
    tpu.vector_store %arg15[%c0_27, %c0_28], %39 {strides = array<i32>} : memref<16x1xf32, #tpu.memory_space<vmem>>, vector<16x1xf32>,
    %41 = tpu.iota {dimensions = array<i32: 0>} : vector<2x16xi32>
    %c0_29 = arith.constant 0 : index
    %c0_30 = arith.constant 0 : index
    %42 = vector.load %arg3[%c0_29, %c0_30] : memref<1x16xi32, #tpu.memory_space<vmem>>, vector<1x16xi32>
    %43 = vector.broadcast %42 : vector<1x16xi32> to vector<2x16xi32>
    %44 = arith.cmpi eq, %43, %41 : vector<2x16xi32>
    %45 = arith.extui %44 : vector<2x16xi1> to vector<2x16xi32>
    %46 = arith.sitofp %45 : vector<2x16xi32> to vector<2x16xf32>
    %47 = vector.broadcast %39 : vector<16x1xf32> to vector<16x32xf32>
    %48 = arith.mulf %47, %16 : vector<16x32xf32>
    %c0_31 = arith.constant 0 : index
    %c0_32 = arith.constant 0 : index
    %49 = vector.load %arg16[%c0_31, %c0_32] : memref<2x32xf32, #tpu.memory_space<vmem>>, vector<2x32xf32>
    %cst_33 = arith.constant dense<0.000000e+00> : vector<2x32xf32>
    %50 = tpu.matmul %46, %48, %cst_33 {dimension_numbers = #tpu.dot_dimension_numbers<[1], [0], [0], [1], [0, 0, 1, 1], [], []>} : vector<2x16xf32>, vector<16x32xf32>, vector<2x32xf32> -> vector<2x32xf32>
    %51 = arith.addf %49, %50 : vector<2x32xf32>
    %c0_34 = arith.constant 0 : index
    %c0_35 = arith.constant 0 : index
    %52 = vector.load %arg16[%c0_34, %c0_35] : memref<2x32xf32, #tpu.memory_space<vmem>>, vector<2x32xf32>
    tpu.vector_store %arg16[%c0_34, %c0_35], %51 {strides = array<i32>} : memref<2x32xf32, #tpu.memory_space<vmem>>, vector<2x32xf32>,
    %c0_36 = arith.constant 0 : index
    %c0_37 = arith.constant 0 : index
    %53 = vector.load %arg17[%c0_36, %c0_37] : memref<2x32xf32, #tpu.memory_space<vmem>>, vector<2x32xf32>
    %cst_38 = arith.constant dense<0.000000e+00> : vector<2x32xf32>
    %54 = tpu.matmul %46, %16, %cst_38 {dimension_numbers = #tpu.dot_dimension_numbers<[1], [0], [0], [1], [0, 0, 1, 1], [], []>} : vector<2x16xf32>, vector<16x32xf32>, vector<2x32xf32> -> vector<2x32xf32>
    %55 = arith.addf %53, %54 : vector<2x32xf32>
    %c0_39 = arith.constant 0 : index
    %c0_40 = arith.constant 0 : index
    %56 = vector.load %arg17[%c0_39, %c0_40] : memref<2x32xf32, #tpu.memory_space<vmem>>, vector<2x32xf32>
    tpu.vector_store %arg17[%c0_39, %c0_40], %55 {strides = array<i32>} : memref<2x32xf32, #tpu.memory_space<vmem>>, vector<2x32xf32>,
    %c0_41 = arith.constant 0 : index
    %c0_42 = arith.constant 0 : index
    %57 = vector.load %arg18[%c0_41, %c0_42] : memref<2x1xf32, #tpu.memory_space<vmem>>, vector<2x1xf32>
    %cst_43 = arith.constant dense<0.000000e+00> : vector<2x1xf32>
    %58 = tpu.matmul %46, %39, %cst_43 {dimension_numbers = #tpu.dot_dimension_numbers<[1], [0], [0], [1], [0, 0, 1, 1], [], []>} : vector<2x16xf32>, vector<16x1xf32>, vector<2x1xf32> -> vector<2x1xf32>
    %59 = arith.addf %57, %58 : vector<2x1xf32>
    %c0_44 = arith.constant 0 : index
    %c0_45 = arith.constant 0 : index
    %60 = vector.load %arg18[%c0_44, %c0_45] : memref<2x1xf32, #tpu.memory_space<vmem>>, vector<2x1xf32>
    tpu.vector_store %arg18[%c0_44, %c0_45], %59 {strides = array<i32>} : memref<2x1xf32, #tpu.memory_space<vmem>>, vector<2x1xf32>,
    %c0_46 = arith.constant 0 : index
    %c0_47 = arith.constant 0 : index
    %61 = vector.load %arg19[%c0_46, %c0_47] : memref<2x1xf32, #tpu.memory_space<vmem>>, vector<2x1xf32>
    %cst_48 = arith.constant dense<0.000000e+00> : vector<2xf32>
    %62 = vector.multi_reduction <add>, %46, %cst_48 [1] : vector<2x16xf32> to vector<2xf32>
    %63 = vector.shape_cast %62 : vector<2xf32> to vector<2x1xf32>
    %64 = arith.addf %61, %63 : vector<2x1xf32>
    %c0_49 = arith.constant 0 : index
    %c0_50 = arith.constant 0 : index
    %65 = vector.load %arg19[%c0_49, %c0_50] : memref<2x1xf32, #tpu.memory_space<vmem>>, vector<2x1xf32>
    tpu.vector_store %arg19[%c0_49, %c0_50], %64 {strides = array<i32>} : memref<2x1xf32, #tpu.memory_space<vmem>>, vector<2x1xf32>,
    %c0_i32_51 = arith.constant 0 : i32
    %66 = arith.cmpi eq, %arg0, %c0_i32_51 : i32
    %67 = arith.extui %66 : i1 to i32
    %c0_i32_52 = arith.constant 0 : i32
    %68 = arith.cmpi ne, %67, %c0_i32_52 : i32
    scf.if %68 {
      %c0_53 = arith.constant 0 : index
      %c0_54 = arith.constant 0 : index
      %69 = vector.load %arg19[%c0_53, %c0_54] : memref<2x1xf32, #tpu.memory_space<vmem>>, vector<2x1xf32>
      %cst_55 = arith.constant 0.000000e+00 : f32
      %70 = vector.broadcast %cst_55 : f32 to vector<2x1xf32>
      %71 = arith.cmpf ogt, %69, %70 : vector<2x1xf32>
      %cst_56 = arith.constant 1.000000e+00 : f32
      %72 = vector.broadcast %cst_56 : f32 to vector<2x1xf32>
      %73 = arith.divf %72, %69 : vector<2x1xf32>
      %cst_57 = arith.constant 0.000000e+00 : f32
      %74 = vector.broadcast %cst_57 : f32 to vector<2x1xf32>
      %75 = arith.select %71, %73, %74 : vector<2x1xi1>, vector<2x1xf32>
      %c0_58 = arith.constant 0 : index
      %c0_59 = arith.constant 0 : index
      %76 = vector.load %arg16[%c0_58, %c0_59] : memref<2x32xf32, #tpu.memory_space<vmem>>, vector<2x32xf32>
      %c0_60 = arith.constant 0 : index
      %c0_61 = arith.constant 0 : index
      %77 = vector.load %arg17[%c0_60, %c0_61] : memref<2x32xf32, #tpu.memory_space<vmem>>, vector<2x32xf32>
      %c0_62 = arith.constant 0 : index
      %c0_63 = arith.constant 0 : index
      %78 = vector.load %arg18[%c0_62, %c0_63] : memref<2x1xf32, #tpu.memory_space<vmem>>, vector<2x1xf32>
      %79 = vector.broadcast %75 : vector<2x1xf32> to vector<2x32xf32>
      %80 = arith.mulf %76, %79 : vector<2x32xf32>
      %c0_64 = arith.constant 0 : index
      %c0_65 = arith.constant 0 : index
      %81 = vector.load %arg11[%c0_64, %c0_65] : memref<2x32xf32, #tpu.memory_space<vmem>>, vector<2x32xf32>
      tpu.vector_store %arg11[%c0_64, %c0_65], %80 {strides = array<i32>} : memref<2x32xf32, #tpu.memory_space<vmem>>, vector<2x32xf32>,
      %82 = arith.subf %77, %76 : vector<2x32xf32>
      %83 = vector.broadcast %75 : vector<2x1xf32> to vector<2x32xf32>
      %84 = arith.mulf %82, %83 : vector<2x32xf32>
      %c0_66 = arith.constant 0 : index
      %c0_67 = arith.constant 0 : index
      %85 = vector.load %arg12[%c0_66, %c0_67] : memref<2x32xf32, #tpu.memory_space<vmem>>, vector<2x32xf32>
      tpu.vector_store %arg12[%c0_66, %c0_67], %84 {strides = array<i32>} : memref<2x32xf32, #tpu.memory_space<vmem>>, vector<2x32xf32>,
      %cst_68 = arith.constant 9.99999993E-9 : f32
      %86 = vector.broadcast %cst_68 : f32 to vector<2x1xf32>
      %87 = arith.addf %78, %86 : vector<2x1xf32>
      %c0_69 = arith.constant 0 : index
      %c0_70 = arith.constant 0 : index
      %88 = vector.load %arg13[%c0_69, %c0_70] : memref<2x1xf32, #tpu.memory_space<vmem>>, vector<2x1xf32>
      tpu.vector_store %arg13[%c0_69, %c0_70], %87 {strides = array<i32>} : memref<2x1xf32, #tpu.memory_space<vmem>>, vector<2x1xf32>,
      %89 = arith.subf %69, %78 : vector<2x1xf32>
      %cst_71 = arith.constant 9.99999993E-9 : f32
      %90 = vector.broadcast %cst_71 : f32 to vector<2x1xf32>
      %91 = arith.addf %89, %90 : vector<2x1xf32>
      %c0_72 = arith.constant 0 : index
      %c0_73 = arith.constant 0 : index
      %92 = vector.load %arg14[%c0_72, %c0_73] : memref<2x1xf32, #tpu.memory_space<vmem>>, vector<2x1xf32>
      tpu.vector_store %arg14[%c0_72, %c0_73], %91 {strides = array<i32>} : memref<2x1xf32, #tpu.memory_space<vmem>>, vector<2x1xf32>,
    } else {
    }
    return
  }
  func.func @transform_0(%arg0: i32) -> (i32, i32) {
    %c0_i32 = arith.constant 0 : i32
    %c0_i32_0 = arith.constant 0 : i32
    return %arg0, %c0_i32 : i32, i32
  }
  func.func @transform_1(%arg0: i32) -> (i32, i32) {
    %c0_i32 = arith.constant 0 : i32
    %c0_i32_0 = arith.constant 0 : i32
    return %arg0, %c0_i32 : i32, i32
  }
  func.func @transform_2(%arg0: i32) -> (i32, i32) {
    %c0_i32 = arith.constant 0 : i32
    %c0_i32_0 = arith.constant 0 : i32
    return %c0_i32, %arg0 : i32, i32
  }
  func.func @transform_3(%arg0: i32) -> (i32, i32) {
    %c0_i32 = arith.constant 0 : i32
    %c0_i32_0 = arith.constant 0 : i32
    return %arg0, %c0_i32 : i32, i32
  }
  func.func @transform_4(%arg0: i32) -> (i32, i32) {
    %c0_i32 = arith.constant 0 : i32
    %c0_i32_0 = arith.constant 0 : i32
    %c0_i32_1 = arith.constant 0 : i32
    return %c0_i32, %c0_i32_0 : i32, i32
  }
  func.func @transform_5(%arg0: i32) -> (i32, i32) {
    %c0_i32 = arith.constant 0 : i32
    %c0_i32_0 = arith.constant 0 : i32
    %c0_i32_1 = arith.constant 0 : i32
    return %c0_i32, %c0_i32_0 : i32, i32
  }
  func.func @transform_6(%arg0: i32) -> (i32, i32) {
    %c0_i32 = arith.constant 0 : i32
    %c0_i32_0 = arith.constant 0 : i32
    %c0_i32_1 = arith.constant 0 : i32
    return %c0_i32, %c0_i32_0 : i32, i32
  }
  func.func @transform_7(%arg0: i32) -> (i32, i32) {
    %c0_i32 = arith.constant 0 : i32
    %c0_i32_0 = arith.constant 0 : i32
    %c0_i32_1 = arith.constant 0 : i32
    return %c0_i32, %c0_i32_0 : i32, i32
  }
  func.func @transform_8(%arg0: i32) -> (i32, i32) {
    %c0_i32 = arith.constant 0 : i32
    %c0_i32_0 = arith.constant 0 : i32
    %c0_i32_1 = arith.constant 0 : i32
    return %c0_i32, %c0_i32_0 : i32, i32
  }
  func.func @transform_9(%arg0: i32) -> (i32, i32) {
    %c0_i32 = arith.constant 0 : i32
    %c0_i32_0 = arith.constant 0 : i32
    %c0_i32_1 = arith.constant 0 : i32
    return %c0_i32, %c0_i32_0 : i32, i32
  }
  func.func @transform_10(%arg0: i32) -> (i32, i32) {
    %c0_i32 = arith.constant 0 : i32
    %c0_i32_0 = arith.constant 0 : i32
    %c0_i32_1 = arith.constant 0 : i32
    return %c0_i32, %c0_i32_0 : i32, i32
  }
  func.func @transform_11(%arg0: i32) -> (i32, i32) {
    %c0_i32 = arith.constant 0 : i32
    %c0_i32_0 = arith.constant 0 : i32
    %c0_i32_1 = arith.constant 0 : i32
    return %c0_i32, %c0_i32_0 : i32, i32
  }
  func.func @transform_12(%arg0: i32) -> (i32, i32) {
    %c0_i32 = arith.constant 0 : i32
    %c0_i32_0 = arith.constant 0 : i32
    %c0_i32_1 = arith.constant 0 : i32
    return %c0_i32, %c0_i32_0 : i32, i32
  }
  func.func @transform_13(%arg0: i32) -> (i32, i32) {
    %c0_i32 = arith.constant 0 : i32
    %c0_i32_0 = arith.constant 0 : i32
    %c0_i32_1 = arith.constant 0 : i32
    return %c0_i32, %c0_i32_0 : i32, i32
  }
  func.func @transform_14(%arg0: i32) -> (i32, i32) {
    %c0_i32 = arith.constant 0 : i32
    %c0_i32_0 = arith.constant 0 : i32
    return %arg0, %c0_i32 : i32, i32
  }
}

</mosaic_0001>

<llo_original>
// kernel: separator_gum_forward.1
$region0: #{separator_gum_forward.1}
  #allocation0 [shape = 'u32[]', space=smem, size = 0x4, offset = 0x4, fixed_abs, tag = 'smem constant byte address 0x4 - core index']
  #allocation1 [shape = 'u32[144,128]{1,0:T(1,128)}', space=vmem, size = 0x12000, scoped, tag = 'internal scratch']
  #allocation2 [shape = 'f32[2,32]{1,0:T(2,128)}', space=vmem, size = 0x400, scoped, tag = 'scratch operand']
  #allocation3 [shape = 'f32[2,32]{1,0:T(2,128)}', space=vmem, size = 0x400, scoped, tag = 'scratch operand']
  #allocation4 [shape = 'f32[2,1]{1,0:T(2,128)}', space=vmem, size = 0x400, scoped, tag = 'scratch operand']
  #allocation5 [shape = 'f32[2,1]{1,0:T(2,128)}', space=vmem, size = 0x400, scoped, tag = 'scratch operand']
  #allocation6 [shape = 'f32[1,1]{1,0:T(1,128)S(1)}', space=vmem, size = 0x200, scoped, tag = 'scoped memory for separator_gum_forward.1']
  %s0 = inlined_call_operand.vmem [shape: bf16[16,8], index: 0, kind: input, shape index: {}]
  %s1 = inlined_call_operand.vmem [shape: bf16[16,32], index: 1, kind: input, shape index: {}]
  %s2 = inlined_call_operand.vmem [shape: s32[1,16], index: 2, kind: input, shape index: {}]
  %s3 = inlined_call_operand.vmem [shape: f32[16,1], index: 3, kind: input, shape index: {}]
  %s4 = inlined_call_operand.vmem [shape: bf16[8,32], index: 4, kind: input, shape index: {}]
  %s5 = inlined_call_operand.vmem [shape: f32[1,32], index: 5, kind: input, shape index: {}]
  %s6 = inlined_call_operand.vmem [shape: f32[32,1], index: 6, kind: input, shape index: {}]
  %s7 = inlined_call_operand.<no memory space> [shape: f32[1,1], index: 7, kind: input, shape index: {}]
  %s8 = inlined_call_operand.vmem [shape: bf16[32,32], index: 8, kind: input, shape index: {}]
  %s9 = inlined_call_operand.vmem [shape: f32[1,32], index: 9, kind: input, shape index: {}]
  %s10 = inlined_call_operand.hbm [shape: f32[2,32], index: 10, kind: output, shape index: {0}]
  %s11 = inlined_call_operand.hbm [shape: f32[2,32], index: 11, kind: output, shape index: {1}]
  %s12 = inlined_call_operand.vmem [shape: f32[2,1], index: 12, kind: output, shape index: {2}]
  %s13 = inlined_call_operand.vmem [shape: f32[2,1], index: 13, kind: output, shape index: {3}]
  %s14 = inlined_call_operand.vmem [shape: f32[16,1], index: 14, kind: output, shape index: {4}]
  %15 = xla_tuple %s10, %s11, %s12, %s13, %s14
  %s16 = sld [smem:[#allocation0]]
  $region90: #{separator_gum_forward.1} parent=0
    _
  %s18 = ssub.s32 1, %s16
  %s19 = scalar_select 0, %s18, %s16
  %v20 = vstv %s7
  %21 = vst [vmem:[#allocation6] sm:$0x1] %v20
  $region1: #{separator_gum_forward.1} parent=0
    #allocation7 [shape = 'u8[1024]{0}', space=vmem, size = 0x400, scoped, tag = 'output window, operand 0, single buffered']
    #allocation8 [shape = 's32[1]{0}', space=sflag, size = 0x4, scoped, tag = 'scoped memory for separator_gum_forward.1']
    #allocation9 [shape = 'u8[1024]{0}', space=vmem, size = 0x400, scoped, tag = 'output window, operand 1, single buffered']
    #allocation10 [shape = 's32[1]{0}', space=sflag, size = 0x4, scoped, tag = 'scoped memory for separator_gum_forward.1']
    %22 = vsyncpa [#allocation8], 0
    %23 = vsyncpa [#allocation10], 0
    // Predicated region
    $region2: #{separator_gum_forward.1} parent=1 // pred_check
      _
    $region3: #{separator_gum_forward.1} parent=1 // pred_check_branch
      %25 = sbr.rel (0) target = $region5
    $region4: #{separator_gum_forward.1} parent=1 // pred_region
      _
    $region5: #{separator_gum_forward.1} parent=1 // pred_fallthru
      _
    // Predicated region
    $region6: #{separator_gum_forward.1} parent=1 // pred_check
      _
    $region7: #{separator_gum_forward.1} parent=1 // pred_check_branch
      %27 = sbr.rel (0) target = $region9
    $region8: #{separator_gum_forward.1} parent=1 // pred_region
      _
    $region9: #{separator_gum_forward.1} parent=1 // pred_fallthru
      _
    // Predicated region
    $region10: #{separator_gum_forward.1} parent=1 // pred_check
      _
    $region11: #{separator_gum_forward.1} parent=1 // pred_check_branch
      %29 = sbr.rel (0) target = $region13
    $region12: #{separator_gum_forward.1} parent=1 // pred_region
      _
    $region13: #{separator_gum_forward.1} parent=1 // pred_fallthru
      _
    // Predicated region
    $region14: #{separator_gum_forward.1} parent=1 // pred_check
      _
    $region15: #{separator_gum_forward.1} parent=1 // pred_check_branch
      %31 = sbr.rel (0) target = $region17
    $region16: #{separator_gum_forward.1} parent=1 // pred_region
      _
    $region17: #{separator_gum_forward.1} parent=1 // pred_fallthru
      _
    // Predicated region
    $region18: #{separator_gum_forward.1} parent=1 // pred_check
      _
    $region19: #{separator_gum_forward.1} parent=1 // pred_check_branch
      %33 = sbr.rel (0) target = $region21
    $region20: #{separator_gum_forward.1} parent=1 // pred_region
      _
    $region21: #{separator_gum_forward.1} parent=1 // pred_fallthru
      _
    // Predicated region
    $region22: #{separator_gum_forward.1} parent=1 // pred_check
      _
    $region23: #{separator_gum_forward.1} parent=1 // pred_check_branch
      %35 = sbr.rel (0) target = $region25
    $region24: #{separator_gum_forward.1} parent=1 // pred_region
      _
    $region25: #{separator_gum_forward.1} parent=1 // pred_fallthru
      _
    // Predicated region
    $region26: #{separator_gum_forward.1} parent=1 // pred_check
      _
    $region27: #{separator_gum_forward.1} parent=1 // pred_check_branch
      %37 = sbr.rel (0) target = $region29
    $region28: #{separator_gum_forward.1} parent=1 // pred_region
      _
    $region29: #{separator_gum_forward.1} parent=1 // pred_fallthru
      _
    // Predicated region
    $region30: #{separator_gum_forward.1} parent=1 // pred_check
      _
    $region31: #{separator_gum_forward.1} parent=1 // pred_check_branch
      %39 = sbr.rel (0) target = $region33
    $region32: #{separator_gum_forward.1} parent=1 // pred_region
      _
    $region33: #{separator_gum_forward.1} parent=1 // pred_fallthru
      _
    // Predicated region
    $region34: #{separator_gum_forward.1} parent=1 // pred_check
      _
    $region35: #{separator_gum_forward.1} parent=1 // pred_check_branch
      %41 = sbr.rel (0) target = $region37
    $region36: #{separator_gum_forward.1} parent=1 // pred_region
      _
    $region37: #{separator_gum_forward.1} parent=1 // pred_fallthru
      _
    // Predicated region
    $region38: #{separator_gum_forward.1} parent=1 // pred_check
      _
    $region39: #{separator_gum_forward.1} parent=1 // pred_check_branch
      %43 = sbr.rel (0) target = $region41
    $region40: #{separator_gum_forward.1} parent=1 // pred_region
      _
    $region41: #{separator_gum_forward.1} parent=1 // pred_fallthru
      _
    %p45 = scmp.eq.s32.totalorder 0, 0
    // Predicated region
    $region42: #{separator_gum_forward.1} parent=1 // pred_check
      %p46 = pneg %p45
    $region43: #{separator_gum_forward.1} parent=1 // pred_check_branch
      %48 = sbr.rel (%p46) target = $region45
    $region44: #{separator_gum_forward.1} parent=1 // pred_region
      %vm49 = vcmask 254976
      %50 = vst.msk [vmem:[#allocation2] sm:$0x3] %vm49, 0.0
      %51 = vst.msk [vmem:[#allocation3] sm:$0x3] %vm49, 0.0
      %vm52 = vcmask 1024
      %53 = vst.msk [vmem:[#allocation4] sm:$0x3] %vm52, 0.0
      %54 = vst.msk [vmem:[#allocation5] sm:$0x3] %vm52, 0.0
    $region45: #{separator_gum_forward.1} parent=1 // pred_fallthru
      _
    %v55 = vld [vmem:[%s0] sm:$0xf]
    %v56 = vld [vmem:[%s0 + $0x4] sm:$0xf]
    %v57 = vld [vmem:[%s4] sm:$0xf]
    %v58 = vld [vmem:[%s5] sm:$0x1]
    %v60 = vlaneseq
    %v61 = vshrl.u32 %v60, 7
    %v62 = vsub.s32 0, %v61
    %v63 = vrot.slane %v58, %v62
    %v67 = vunpack.c.l.b16 %v55
    %v68 = vunpack.c.l.b16 %v56
    %v69 = vpack.c.b16 %v68, %v67
    %vm70 = vcmask 64512
    %v72 = vsel %vm70, %v69, 0
    %vm74 = vcmask 1043456
    %v76 = vsel %vm74, %v57, 0
    %78 = vmatprep.subr.bf16.mxu0 0
    %79 = vmatpush1.bf16.msra.mxu0 %v76
    %80 = vmatprep.subr.bf16.mxu0 0
    %81 = vmatpush1.bf16.msra.mxu0 0
    %82 = vmatprep.subr.bf16.mxu0 0
    %83 = vmatpush1.bf16.msra.mxu0 0
    %84 = vmatprep.subr.bf16.mxu0 0
    %85 = vmatpush1.bf16.msra.mxu0 0
    %86 = vmatprep.subr.bf16.mxu0 0
    %87 = vmatpush1.bf16.msra.mxu0 0
    %88 = vmatprep.subr.bf16.mxu0 0
    %89 = vmatpush1.bf16.msra.mxu0 0
    %90 = vmatprep.subr.bf16.mxu0 0
    %91 = vmatpush1.bf16.msra.mxu0 0
    %92 = vmatprep.subr.bf16.mxu0 0
    %93 = vmatpush1.bf16.msra.mxu0 0
    %94 = vmatprep.subr.bf16.mxu0 0
    %95 = vmatpush1.bf16.msra.mxu0 0
    %96 = vmatprep.subr.bf16.mxu0 0
    %97 = vmatpush1.bf16.msra.mxu0 0
    %98 = vmatprep.subr.bf16.mxu0 0
    %99 = vmatpush1.bf16.msra.mxu0 0
    %100 = vmatprep.subr.bf16.mxu0 0
    %101 = vmatpush1.bf16.msra.mxu0 0
    %102 = vmatprep.subr.bf16.mxu0 0
    %103 = vmatpush1.bf16.msra.mxu0 0
    %104 = vmatprep.subr.bf16.mxu0 0
    %105 = vmatpush1.bf16.msra.mxu0 0
    %106 = vmatprep.subr.bf16.mxu0 0
    %107 = vmatpush1.bf16.msra.mxu0 0
    %108 = vmatprep.subr.bf16.mxu0 0
    %109 = vmatpush1.bf16.msra.mxu0 0
    %110 = vmatprep.mubr.bf16.mxu0 0
    %111 = vmatmul.mubr.bf16.gmra.mrb[0].mxu0 %v72
    %v112 = vpop.f32.mrb[0].mxu0
    %v113 = vadd.f32 %v63, %v112
    %v114 = vpop.f32.mrb[0].mxu0
    %v115 = vpop.f32.mrb[0].mxu0
    %v116 = vadd.f32 %v63, %v115
    %v117 = vpop.f32.mrb[0].mxu0
    %118 = vdwg.mxu0
    %v119 = vmax.f32 %v113, 0.0
    %v120 = vmax.f32 %v116, 0.0
    %v121 = vld [vmem:[%s1] sm:$0xf]
    %v122 = vld [vmem:[%s1 + $0x4] sm:$0xf]
    %v123 = vld [vmem:[%s8] sm:$0xf]
    %v124 = vld [vmem:[%s8 + $0x4] sm:$0xf]
    %v125 = vld [vmem:[%s8 + $0x8] sm:$0xf]
    %v126 = vld [vmem:[%s8 + $0xc] sm:$0xf]
    %v127 = vld [vmem:[%s9] sm:$0x1]
    %v129 = vlaneseq
    %v130 = vshrl.u32 %v129, 7
    %v131 = vsub.s32 0, %v130
    %v132 = vrot.slane %v127, %v131
    %v136 = vunpack.c.l.b16 %v121
    %v137 = vunpack.c.l.b16 %v122
    %v138 = vpack.c.b16 %v137, %v136
    %v143 = vunpack.c.l.b16 %v123
    %v144 = vunpack.c.l.b16 %v124
    %v145 = vunpack.c.l.b16 %v125
    %v146 = vunpack.c.l.b16 %v126
    %v147 = vpack.c.b16 %v144, %v143
    %v148 = vpack.c.b16 %v146, %v145
    %vm151 = vcmask 261120
    %v153 = vsel %vm151, %v138, 0
    %155 = vmatprep.subr.bf16.mxu0 0
    %156 = vmatpush1.bf16.msra.mxu0 %v147
    %157 = vmatprep.subr.bf16.mxu0 0
    %158 = vmatpush1.bf16.msra.mxu0 %v148
    %159 = vmatprep.subr.bf16.mxu0 0
    %160 = vmatpush1.bf16.msra.mxu0 0
    %161 = vmatprep.subr.bf16.mxu0 0
    %162 = vmatpush1.bf16.msra.mxu0 0
    %163 = vmatprep.subr.bf16.mxu0 0
    %164 = vmatpush1.bf16.msra.mxu0 0
    %165 = vmatprep.subr.bf16.mxu0 0
    %166 = vmatpush1.bf16.msra.mxu0 0
    %167 = vmatprep.subr.bf16.mxu0 0
    %168 = vmatpush1.bf16.msra.mxu0 0
    %169 = vmatprep.subr.bf16.mxu0 0
    %170 = vmatpush1.bf16.msra.mxu0 0
    %171 = vmatprep.subr.bf16.mxu0 0
    %172 = vmatpush1.bf16.msra.mxu0 0
    %173 = vmatprep.subr.bf16.mxu0 0
    %174 = vmatpush1.bf16.msra.mxu0 0
    %175 = vmatprep.subr.bf16.mxu0 0
    %176 = vmatpush1.bf16.msra.mxu0 0
    %177 = vmatprep.subr.bf16.mxu0 0
    %178 = vmatpush1.bf16.msra.mxu0 0
    %179 = vmatprep.subr.bf16.mxu0 0
    %180 = vmatpush1.bf16.msra.mxu0 0
    %181 = vmatprep.subr.bf16.mxu0 0
    %182 = vmatpush1.bf16.msra.mxu0 0
    %183 = vmatprep.subr.bf16.mxu0 0
    %184 = vmatpush1.bf16.msra.mxu0 0
    %185 = vmatprep.subr.bf16.mxu0 0
    %186 = vmatpush1.bf16.msra.mxu0 0
    %187 = vmatprep.mubr.bf16.mxu0 0
    %188 = vmatmul.mubr.bf16.gmra.mrb[0].mxu0 %v153
    %v189 = vpop.f32.mrb[0].mxu0
    %v190 = vadd.f32 %v132, %v189
    %v191 = vpop.f32.mrb[0].mxu0
    %v192 = vpop.f32.mrb[0].mxu0
    %v193 = vadd.f32 %v132, %v192
    %v194 = vpop.f32.mrb[0].mxu0
    %195 = vdwg.mxu0
    %v196 = vld [vmem:[%s6] sm:$0xff]
    %v197 = vld [vmem:[%s6 + $0x8] sm:$0xff]
    %v198 = vld [vmem:[%s6 + $0x10] sm:$0xff]
    %v199 = vld [vmem:[%s6 + $0x18] sm:$0xff]
    %v200 = vld [vmem:[#allocation6] sm:$0x1]
    %v202 = vlaneseq
    %v203 = vshrl.u32 %v202, 7
    %v204 = vsub.s32 0, %v203
    %v205 = vrot.slane %v200, %v204
    %v208 = vsel %vm151, %v119, 0
    %v211 = vsel %vm151, %v120, 0
    %213 = vmatprep.subr.mxu0 0.0
    %214 = vmatpush1.msra.mxu0 %v196
    %215 = vmatprep.subr.mxu0 0.0
    %216 = vmatpush1.msra.mxu0 %v197
    %217 = vmatprep.subr.mxu0 0.0
    %218 = vmatpush1.msra.mxu0 %v198
    %219 = vmatprep.subr.mxu0 0.0
    %220 = vmatpush1.msra.mxu0 %v199
    %221 = vmatprep.subr.mxu0 0.0
    %222 = vmatpush1.msra.mxu0 0.0
    %223 = vmatprep.subr.mxu0 0.0
    %224 = vmatpush1.msra.mxu0 0.0
    %225 = vmatprep.subr.mxu0 0.0
    %226 = vmatpush1.msra.mxu0 0.0
    %227 = vmatprep.subr.mxu0 0.0
    %228 = vmatpush1.msra.mxu0 0.0
    %229 = vmatprep.subr.mxu0 0.0
    %230 = vmatpush1.msra.mxu0 0.0
    %231 = vmatprep.subr.mxu0 0.0
    %232 = vmatpush1.msra.mxu0 0.0
    %233 = vmatprep.subr.mxu0 0.0
    %234 = vmatpush1.msra.mxu0 0.0
    %235 = vmatprep.subr.mxu0 0.0
    %236 = vmatpush1.msra.mxu0 0.0
    %237 = vmatprep.subr.mxu0 0.0
    %238 = vmatpush1.msra.mxu0 0.0
    %239 = vmatprep.subr.mxu0 0.0
    %240 = vmatpush1.msra.mxu0 0.0
    %241 = vmatprep.subr.mxu0 0.0
    %242 = vmatpush1.msra.mxu0 0.0
    %243 = vmatprep.subr.mxu0 0.0
    %244 = vmatpush1.msra.mxu0 0.0
    %245 = vmatprep.subr.mxu0 0.0
    %246 = vmatpush1.msra.mxu0 0.0
    %247 = vmatprep.subr.mxu0 0.0
    %248 = vmatpush1.msra.mxu0 0.0
    %249 = vmatprep.subr.mxu0 0.0
    %250 = vmatpush1.msra.mxu0 0.0
    %251 = vmatprep.subr.mxu0 0.0
    %252 = vmatpush1.msra.mxu0 0.0
    %253 = vmatprep.subr.mxu0 0.0
    %254 = vmatpush1.msra.mxu0 0.0
    %255 = vmatprep.subr.mxu0 0.0
    %256 = vmatpush1.msra.mxu0 0.0
    %257 = vmatprep.subr.mxu0 0.0
    %258 = vmatpush1.msra.mxu0 0.0
    %259 = vmatprep.subr.mxu0 0.0
    %260 = vmatpush1.msra.mxu0 0.0
    %261 = vmatprep.subr.mxu0 0.0
    %262 = vmatpush1.msra.mxu0 0.0
    %263 = vmatprep.subr.mxu0 0.0
    %264 = vmatpush1.msra.mxu0 0.0
    %265 = vmatprep.subr.mxu0 0.0
    %266 = vmatpush1.msra.mxu0 0.0
    %267 = vmatprep.subr.mxu0 0.0
    %268 = vmatpush1.msra.mxu0 0.0
    %269 = vmatprep.subr.mxu0 0.0
    %270 = vmatpush1.msra.mxu0 0.0
    %271 = vmatprep.subr.mxu0 0.0
    %272 = vmatpush1.msra.mxu0 0.0
    %273 = vmatprep.subr.mxu0 0.0
    %274 = vmatpush1.msra.mxu0 0.0
    %275 = vmatprep.subr.mxu0 0.0
    %276 = vmatpush1.msra.mxu0 0.0
    %277 = vmatprep.mubr.f32.mxu0 0.0
    %278 = vmatmul.mubr.f32.gmra.mrb[0].mxu0 %v208
    %v279 = vpop.f32.mrb[0].mxu0
    %v280 = vadd.f32 %v205, %v279
    %v281 = vpop.f32.mrb[0].mxu0
    %282 = vmatprep.mubr.f32.mxu0 0.0
    %283 = vmatmul.mubr.f32.gmra.mrb[0].mxu0 %v211
    %v284 = vpop.f32.mrb[0].mxu0
    %v285 = vadd.f32 %v205, %v284
    %v286 = vpop.f32.mrb[0].mxu0
    %287 = vdwg.mxu0
    %v288 = vld [vmem:[%s3] sm:$0xff]
    %v289 = vld [vmem:[%s3 + $0x8] sm:$0xff]
    %v290 = vmax.f32 %v288, 1e-06
    %v291 = vmax.f32 %v289, 1e-06
    %v292 = vmin.f32 %v290, 0.999999
    %v293 = vmin.f32 %v291, 0.999999
    %v294 = vlog2.pop %v292
    %v295 = vmul.f32 %v294, 0.6931472
    %v296 = vlog2.pop %v293
    %v297 = vmul.f32 %v296, 0.6931472
    %v298 = vsub.f32 1.0, %v292
    %v299 = vsub.f32 1.0, %v293
    %v300 = vlog2.pop %v298
    %v301 = vmul.f32 %v300, 0.6931472
    %v302 = vlog2.pop %v299
    %v303 = vmul.f32 %v302, 0.6931472
    %v304 = vsub.f32 %v295, %v301
    %v305 = vsub.f32 %v297, %v303
    %v306 = vadd.f32 %v280, %v304
    %v307 = vadd.f32 %v285, %v305
    %v308 = vsub.f32 0.0, %v306
    %v309 = vsub.f32 0.0, %v307
    %v310 = vmul.f32 %v308, 1.442695
    %v311 = vpow.pop %v310
    %v312 = vmul.f32 %v309, 1.442695
    %v313 = vpow.pop %v312
    %v314 = vadd.f32 %v311, 1.0
    %v315 = vadd.f32 %v313, 1.0
    %v316 = vrcp.pop %v314
    %v317 = vmul.f32 1.0, %v316
    %v318 = vrcp.pop %v315
    %v319 = vmul.f32 1.0, %v318
    %vm320 = vcmask 7168
    %321 = vst.msk [vmem:[%s14] sm:$0xff] %vm320, %v317
    %322 = vst.msk [vmem:[%s14 + $0x8] sm:$0xff] %vm320, %v319
    %v323 = vlaneseq
    %v324 = vshrl.u32 %v323, 7
    %v325 = vld [vmem:[%s2] sm:$0x1]
    %v326 = vlaneseq
    %v327 = vshrl.u32 %v326, 7
    %v328 = vsub.s32 0, %v327
    %v329 = vrot.slane %v325, %v328
    %vm330 = vcmp.eq.s32.totalorder %v329, %v324
    %v331 = vsel %vm330, 1, 0
    %v332 = vcvt.s32.f32 %v331
    %334 = vset.pattern.permute.xlu0 0
    %335 = vperm.xlu0 %334, %v317
    %v336 = vpop.permute.xlu0 %335
    %339 = vset.pattern.permute.xlu0 0
    %340 = vperm.xlu0 %339, %v319
    %v341 = vpop.permute.xlu0 %340
    %v343 = vmul.f32 %v336, %v190
    %v344 = vmul.f32 %v341, %v193
    %v345 = vld [vmem:[#allocation2] sm:$0x3]
    %vm346 = vcmask 130048
    %v348 = vsel %vm346, %v332, 0
    %350 = vmatprep.subr.mxu0 0.0
    %351 = vmatpush1.msra.mxu0 %v343
    %352 = vmatprep.subr.mxu0 0.0
    %353 = vmatpush1.msra.mxu0 %v344
    %354 = vmatprep.subr.mxu0 0.0
    %355 = vmatpush1.msra.mxu0 0.0
    %356 = vmatprep.subr.mxu0 0.0
    %357 = vmatpush1.msra.mxu0 0.0
    %358 = vmatprep.subr.mxu0 0.0
    %359 = vmatpush1.msra.mxu0 0.0
    %360 = vmatprep.subr.mxu0 0.0
    %361 = vmatpush1.msra.mxu0 0.0
    %362 = vmatprep.subr.mxu0 0.0
    %363 = vmatpush1.msra.mxu0 0.0
    %364 = vmatprep.subr.mxu0 0.0
    %365 = vmatpush1.msra.mxu0 0.0
    %366 = vmatprep.subr.mxu0 0.0
    %367 = vmatpush1.msra.mxu0 0.0
    %368 = vmatprep.subr.mxu0 0.0
    %369 = vmatpush1.msra.mxu0 0.0
    %370 = vmatprep.subr.mxu0 0.0
    %371 = vmatpush1.msra.mxu0 0.0
    %372 = vmatprep.subr.mxu0 0.0
    %373 = vmatpush1.msra.mxu0 0.0
    %374 = vmatprep.subr.mxu0 0.0
    %375 = vmatpush1.msra.mxu0 0.0
    %376 = vmatprep.subr.mxu0 0.0
    %377 = vmatpush1.msra.mxu0 0.0
    %378 = vmatprep.subr.mxu0 0.0
    %379 = vmatpush1.msra.mxu0 0.0
    %380 = vmatprep.subr.mxu0 0.0
    %381 = vmatpush1.msra.mxu0 0.0
    %382 = vmatprep.subr.mxu0 0.0
    %383 = vmatpush1.msra.mxu0 0.0
    %384 = vmatprep.subr.mxu0 0.0
    %385 = vmatpush1.msra.mxu0 0.0
    %386 = vmatprep.subr.mxu0 0.0
    %387 = vmatpush1.msra.mxu0 0.0
    %388 = vmatprep.subr.mxu0 0.0
    %389 = vmatpush1.msra.mxu0 0.0
    %390 = vmatprep.subr.mxu0 0.0
    %391 = vmatpush1.msra.mxu0 0.0
    %392 = vmatprep.subr.mxu0 0.0
    %393 = vmatpush1.msra.mxu0 0.0
    %394 = vmatprep.subr.mxu0 0.0
    %395 = vmatpush1.msra.mxu0 0.0
    %396 = vmatprep.subr.mxu0 0.0
    %397 = vmatpush1.msra.mxu0 0.0
    %398 = vmatprep.subr.mxu0 0.0
    %399 = vmatpush1.msra.mxu0 0.0
    %400 = vmatprep.subr.mxu0 0.0
    %401 = vmatpush1.msra.mxu0 0.0
    %402 = vmatprep.subr.mxu0 0.0
    %403 = vmatpush1.msra.mxu0 0.0
    %404 = vmatprep.subr.mxu0 0.0
    %405 = vmatpush1.msra.mxu0 0.0
    %406 = vmatprep.subr.mxu0 0.0
    %407 = vmatpush1.msra.mxu0 0.0
    %408 = vmatprep.subr.mxu0 0.0
    %409 = vmatpush1.msra.mxu0 0.0
    %410 = vmatprep.subr.mxu0 0.0
    %411 = vmatpush1.msra.mxu0 0.0
    %412 = vmatprep.subr.mxu0 0.0
    %413 = vmatpush1.msra.mxu0 0.0
    %414 = vmatprep.mubr.f32.mxu0 0.0
    %415 = vmatmul.mubr.f32.gmra.mrb[0].mxu0 %v348
    %v416 = vpop.f32.mrb[0].mxu0
    %v417 = vadd.f32 0.0, %v416
    %v418 = vpop.f32.mrb[0].mxu0
    %419 = vdwg.mxu0
    %v420 = vadd.f32 %v345, %v417
    %vm421 = vcmask 254976
    %422 = vst.msk [vmem:[#allocation2] sm:$0x3] %vm421, %v420
    %v423 = vld [vmem:[#allocation3] sm:$0x3]
    %424 = vmatprep.subr.mxu0 0.0
    %425 = vmatpush1.msra.mxu0 %v190
    %426 = vmatprep.subr.mxu0 0.0
    %427 = vmatpush1.msra.mxu0 %v193
    %428 = vmatprep.subr.mxu0 0.0
    %429 = vmatpush1.msra.mxu0 0.0
    %430 = vmatprep.subr.mxu0 0.0
    %431 = vmatpush1.msra.mxu0 0.0
    %432 = vmatprep.subr.mxu0 0.0
    %433 = vmatpush1.msra.mxu0 0.0
    %434 = vmatprep.subr.mxu0 0.0
    %435 = vmatpush1.msra.mxu0 0.0
    %436 = vmatprep.subr.mxu0 0.0
    %437 = vmatpush1.msra.mxu0 0.0
    %438 = vmatprep.subr.mxu0 0.0
    %439 = vmatpush1.msra.mxu0 0.0
    %440 = vmatprep.subr.mxu0 0.0
    %441 = vmatpush1.msra.mxu0 0.0
    %442 = vmatprep.subr.mxu0 0.0
    %443 = vmatpush1.msra.mxu0 0.0
    %444 = vmatprep.subr.mxu0 0.0
    %445 = vmatpush1.msra.mxu0 0.0
    %446 = vmatprep.subr.mxu0 0.0
    %447 = vmatpush1.msra.mxu0 0.0
    %448 = vmatprep.subr.mxu0 0.0
    %449 = vmatpush1.msra.mxu0 0.0
    %450 = vmatprep.subr.mxu0 0.0
    %451 = vmatpush1.msra.mxu0 0.0
    %452 = vmatprep.subr.mxu0 0.0
    %453 = vmatpush1.msra.mxu0 0.0
    %454 = vmatprep.subr.mxu0 0.0
    %455 = vmatpush1.msra.mxu0 0.0
    %456 = vmatprep.subr.mxu0 0.0
    %457 = vmatpush1.msra.mxu0 0.0
    %458 = vmatprep.subr.mxu0 0.0
    %459 = vmatpush1.msra.mxu0 0.0
    %460 = vmatprep.subr.mxu0 0.0
    %461 = vmatpush1.msra.mxu0 0.0
    %462 = vmatprep.subr.mxu0 0.0
    %463 = vmatpush1.msra.mxu0 0.0
    %464 = vmatprep.subr.mxu0 0.0
    %465 = vmatpush1.msra.mxu0 0.0
    %466 = vmatprep.subr.mxu0 0.0
    %467 = vmatpush1.msra.mxu0 0.0
    %468 = vmatprep.subr.mxu0 0.0
    %469 = vmatpush1.msra.mxu0 0.0
    %470 = vmatprep.subr.mxu0 0.0
    %471 = vmatpush1.msra.mxu0 0.0
    %472 = vmatprep.subr.mxu0 0.0
    %473 = vmatpush1.msra.mxu0 0.0
    %474 = vmatprep.subr.mxu0 0.0
    %475 = vmatpush1.msra.mxu0 0.0
    %476 = vmatprep.subr.mxu0 0.0
    %477 = vmatpush1.msra.mxu0 0.0
    %478 = vmatprep.subr.mxu0 0.0
    %479 = vmatpush1.msra.mxu0 0.0
    %480 = vmatprep.subr.mxu0 0.0
    %481 = vmatpush1.msra.mxu0 0.0
    %482 = vmatprep.subr.mxu0 0.0
    %483 = vmatpush1.msra.mxu0 0.0
    %484 = vmatprep.subr.mxu0 0.0
    %485 = vmatpush1.msra.mxu0 0.0
    %486 = vmatprep.subr.mxu0 0.0
    %487 = vmatpush1.msra.mxu0 0.0
    %488 = vmatprep.mubr.f32.mxu0 0.0
    %489 = vmatmul.mubr.f32.gmra.mrb[0].mxu0 %v348
    %v490 = vpop.f32.mrb[0].mxu0
    %v491 = vadd.f32 0.0, %v490
    %v492 = vpop.f32.mrb[0].mxu0
    %493 = vdwg.mxu0
    %v494 = vadd.f32 %v423, %v491
    %495 = vst.msk [vmem:[#allocation3] sm:$0x3] %vm421, %v494
    %v496 = vld [vmem:[#allocation4] sm:$0x3]
    %497 = vmatprep.subr.mxu0 0.0
    %498 = vmatpush1.msra.mxu0 %v317
    %499 = vmatprep.subr.mxu0 0.0
    %500 = vmatpush1.msra.mxu0 %v319
    %501 = vmatprep.subr.mxu0 0.0
    %502 = vmatpush1.msra.mxu0 0.0
    %503 = vmatprep.subr.mxu0 0.0
    %504 = vmatpush1.msra.mxu0 0.0
    %505 = vmatprep.subr.mxu0 0.0
    %506 = vmatpush1.msra.mxu0 0.0
    %507 = vmatprep.subr.mxu0 0.0
    %508 = vmatpush1.msra.mxu0 0.0
    %509 = vmatprep.subr.mxu0 0.0
    %510 = vmatpush1.msra.mxu0 0.0
    %511 = vmatprep.subr.mxu0 0.0
    %512 = vmatpush1.msra.mxu0 0.0
    %513 = vmatprep.subr.mxu0 0.0
    %514 = vmatpush1.msra.mxu0 0.0
    %515 = vmatprep.subr.mxu0 0.0
    %516 = vmatpush1.msra.mxu0 0.0
    %517 = vmatprep.subr.mxu0 0.0
    %518 = vmatpush1.msra.mxu0 0.0
    %519 = vmatprep.subr.mxu0 0.0
    %520 = vmatpush1.msra.mxu0 0.0
    %521 = vmatprep.subr.mxu0 0.0
    %522 = vmatpush1.msra.mxu0 0.0
    %523 = vmatprep.subr.mxu0 0.0
    %524 = vmatpush1.msra.mxu0 0.0
    %525 = vmatprep.subr.mxu0 0.0
    %526 = vmatpush1.msra.mxu0 0.0
    %527 = vmatprep.subr.mxu0 0.0
    %528 = vmatpush1.msra.mxu0 0.0
    %529 = vmatprep.subr.mxu0 0.0
    %530 = vmatpush1.msra.mxu0 0.0
    %531 = vmatprep.subr.mxu0 0.0
    %532 = vmatpush1.msra.mxu0 0.0
    %533 = vmatprep.subr.mxu0 0.0
    %534 = vmatpush1.msra.mxu0 0.0
    %535 = vmatprep.subr.mxu0 0.0
    %536 = vmatpush1.msra.mxu0 0.0
    %537 = vmatprep.subr.mxu0 0.0
    %538 = vmatpush1.msra.mxu0 0.0
    %539 = vmatprep.subr.mxu0 0.0
    %540 = vmatpush1.msra.mxu0 0.0
    %541 = vmatprep.subr.mxu0 0.0
    %542 = vmatpush1.msra.mxu0 0.0
    %543 = vmatprep.subr.mxu0 0.0
    %544 = vmatpush1.msra.mxu0 0.0
    %545 = vmatprep.subr.mxu0 0.0
    %546 = vmatpush1.msra.mxu0 0.0
    %547 = vmatprep.subr.mxu0 0.0
    %548 = vmatpush1.msra.mxu0 0.0
    %549 = vmatprep.subr.mxu0 0.0
    %550 = vmatpush1.msra.mxu0 0.0
    %551 = vmatprep.subr.mxu0 0.0
    %552 = vmatpush1.msra.mxu0 0.0
    %553 = vmatprep.subr.mxu0 0.0
    %554 = vmatpush1.msra.mxu0 0.0
    %555 = vmatprep.subr.mxu0 0.0
    %556 = vmatpush1.msra.mxu0 0.0
    %557 = vmatprep.subr.mxu0 0.0
    %558 = vmatpush1.msra.mxu0 0.0
    %559 = vmatprep.subr.mxu0 0.0
    %560 = vmatpush1.msra.mxu0 0.0
    %561 = vmatprep.mubr.f32.mxu0 0.0
    %562 = vmatmul.mubr.f32.gmra.mrb[0].mxu0 %v348
    %v563 = vpop.f32.mrb[0].mxu0
    %v564 = vadd.f32 0.0, %v563
    %v565 = vpop.f32.mrb[0].mxu0
    %566 = vdwg.mxu0
    %v567 = vadd.f32 %v496, %v564
    %vm568 = vcmask 1024
    %569 = vst.msk [vmem:[#allocation4] sm:$0x3] %vm568, %v567
    %v570 = vld [vmem:[#allocation5] sm:$0x3]
    %vm571 = vcmask 123904
    %v572 = vsel %vm571, %v332, 0.0
    %573 = vadd.xlane.f32.xlu0 %v572
    %v574 = vpop.xlane.xlu0 %573
    %v575 = vadd.f32 %v570, %v574
    %576 = vst.msk [vmem:[#allocation5] sm:$0x3] %vm568, %v575
    // Predicated region
    $region46: #{separator_gum_forward.1} parent=1 // pred_check
      %p577 = pneg %p45
    $region47: #{separator_gum_forward.1} parent=1 // pred_check_branch
      %579 = sbr.rel (%p577) target = $region49
    $region48: #{separator_gum_forward.1} parent=1 // pred_region
      %v580 = vld [vmem:[#allocation5] sm:$0x3]
      %vm581 = vcmp.gt.f32.partialorder %v580, 0.0
      %v582 = vrcp.pop %v580
      %v583 = vmul.f32 1.0, %v582
      %v584 = vsel %vm581, %v583, 0.0
      %v585 = vld [vmem:[#allocation2] sm:$0x3]
      %v586 = vld [vmem:[#allocation3] sm:$0x3]
      %v587 = vld [vmem:[#allocation4] sm:$0x3]
      %589 = vset.pattern.permute.xlu0 0
      %590 = vperm.xlu0 %589, %v584
      %v591 = vpop.permute.xlu0 %590
      %v593 = vmul.f32 %v585, %v591
      %594 = vst.msk [vmem:[#allocation7] sm:$0x3] %vm421, %v593
      %v595 = vsub.f32 %v586, %v585
      %v596 = vmul.f32 %v595, %v591
      %597 = vst.msk [vmem:[#allocation9] sm:$0x3] %vm421, %v596
      %v598 = vadd.f32 %v587, 1e-08
      %599 = vst.msk [vmem:[%s12] sm:$0x3] %vm568, %v598
      %v600 = vsub.f32 %v580, %v587
      %v601 = vadd.f32 %v600, 1e-08
      %602 = vst.msk [vmem:[%s13] sm:$0x3] %vm568, %v601
    $region49: #{separator_gum_forward.1} parent=1 // pred_fallthru
      _
    // Predicated region
    $region50: #{separator_gum_forward.1} parent=1 // pred_check
      _
    $region51: #{separator_gum_forward.1} parent=1 // pred_check_branch
      %604 = sbr.rel (0) target = $region53
    $region52: #{separator_gum_forward.1} parent=1 // pred_region
      %s606 = ssub.s32 32, 32
      %607 = vsyncadd [#allocation8], %s606
      %s609 = sshll.u32 [#allocation7], 4
      %s610 = int_to_ptr.vmem [resolvable:$true] %s609
      %612 = dma.vmem_to_hbm [thread:$0]  %s610, 32, %s10, [#allocation8]
    $region53: #{separator_gum_forward.1} parent=1 // pred_fallthru
      _
    // Predicated region
    $region54: #{separator_gum_forward.1} parent=1 // pred_check
      _
    $region55: #{separator_gum_forward.1} parent=1 // pred_check_branch
      %614 = sbr.rel (0) target = $region57
    $region56: #{separator_gum_forward.1} parent=1 // pred_region
      %s616 = ssub.s32 32, 32
      %617 = vsyncadd [#allocation10], %s616
      %s619 = sshll.u32 [#allocation9], 4
      %s620 = int_to_ptr.vmem [resolvable:$true] %s619
      %622 = dma.vmem_to_hbm [thread:$0]  %s620, 32, %s11, [#allocation10]
    $region57: #{separator_gum_forward.1} parent=1 // pred_fallthru
      _
    // Predicated region
    $region58: #{separator_gum_forward.1} parent=1 // pred_check
      _
    $region59: #{separator_gum_forward.1} parent=1 // pred_check_branch
      %624 = sbr.rel (0) target = $region61
    $region60: #{separator_gum_forward.1} parent=1 // pred_region
      _
    $region61: #{separator_gum_forward.1} parent=1 // pred_fallthru
      _
    // Predicated region
    $region62: #{separator_gum_forward.1} parent=1 // pred_check
      _
    $region63: #{separator_gum_forward.1} parent=1 // pred_check_branch
      %626 = sbr.rel (0) target = $region65
    $region64: #{separator_gum_forward.1} parent=1 // pred_region
      _
    $region65: #{separator_gum_forward.1} parent=1 // pred_fallthru
      _
    // Predicated region
    $region66: #{separator_gum_forward.1} parent=1 // pred_check
      _
    $region67: #{separator_gum_forward.1} parent=1 // pred_check_branch
      %628 = sbr.rel (0) target = $region69
    $region68: #{separator_gum_forward.1} parent=1 // pred_region
      _
    $region69: #{separator_gum_forward.1} parent=1 // pred_fallthru
      _
    // Predicated region
    $region70: #{separator_gum_forward.1} parent=1 // pred_check
      _
    $region71: #{separator_gum_forward.1} parent=1 // pred_check_branch
      %630 = sbr.rel (0) target = $region73
    $region72: #{separator_gum_forward.1} parent=1 // pred_region
      %631 = dma.done [#allocation8], 32
    $region73: #{separator_gum_forward.1} parent=1 // pred_fallthru
      _
    // Predicated region
    $region74: #{separator_gum_forward.1} parent=1 // pred_check
      _
    $region75: #{separator_gum_forward.1} parent=1 // pred_check_branch
      %633 = sbr.rel (0) target = $region77
    $region76: #{separator_gum_forward.1} parent=1 // pred_region
      %634 = dma.done [#allocation10], 32
    $region77: #{separator_gum_forward.1} parent=1 // pred_fallthru
      _
    // Predicated region
    $region78: #{separator_gum_forward.1} parent=1 // pred_check
      _
    $region79: #{separator_gum_forward.1} parent=1 // pred_check_branch
      %636 = sbr.rel (0) target = $region81
    $region80: #{separator_gum_forward.1} parent=1 // pred_region
      _
    $region81: #{separator_gum_forward.1} parent=1 // pred_fallthru
      _
    // Predicated region
    $region82: #{separator_gum_forward.1} parent=1 // pred_check
      _
    $region83: #{separator_gum_forward.1} parent=1 // pred_check_branch
      %638 = sbr.rel (0) target = $region85
    $region84: #{separator_gum_forward.1} parent=1 // pred_region
      _
    $region85: #{separator_gum_forward.1} parent=1 // pred_fallthru
      _
    // Predicated region
    $region86: #{separator_gum_forward.1} parent=1 // pred_check
      _
    $region87: #{separator_gum_forward.1} parent=1 // pred_check_branch
      %640 = sbr.rel (0) target = $region89
    $region88: #{separator_gum_forward.1} parent=1 // pred_region
      _
    $region89: #{separator_gum_forward.1} parent=1 // pred_fallthru
      _
    %641 = vsyncpa [#allocation8], 1
    %642 = vsyncpa [#allocation10], 1

</llo_original>
